<compile_context>
chip_gen: v6e
topology: v6e:2x2x1
jax: 0.10.0
libtpu: 0.0.40
codegen_flags: <defaults>
</compile_context>

<pallas_src>
import jax
import jax.numpy as jnp
from jax import lax
from jax.experimental import pallas as pl
from jax.experimental.pallas import tpu as pltpu

D = 128          # in_channels
K = 20           # number of classes (mask_norm dim)
M = 10           # num_prototype
GS = 32          # lane stride per prototype group (32-aligned slices)
KP = 384         # packed prototype columns: M*GS=320 zero-padded to 3x128 lanes
LN_EPS = 1e-5    # nn.LayerNorm default eps
L2_EPS = 1e-12   # F.normalize default eps


def _round_up(x, m):
    return (x + m - 1) // m * m


def proto_head_kernel(feat_ref, w_ref, fg_ref, fb_ref, mg_ref, mb_ref, out_ref):
    # feat_norm: LayerNorm over D (f32 math).
    x = feat_ref[...].astype(jnp.float32)                        # [TN, D]
    mean = jnp.mean(x, axis=-1, keepdims=True)
    xc = x - mean
    var = jnp.mean(xc * xc, axis=-1, keepdims=True)
    x = xc * lax.rsqrt(var + LN_EPS)
    x = x * fg_ref[...] + fb_ref[...]
    # NOTE(v6e/v7x): the affine + l2 scaling could run in bf16 (2x VALU throughput,
    # stats stay f32); kept in f32 so the same kernel is also optimal/exact on v5e.

    # l2_normalize over D:  x / max(||x||, eps) == x * rsqrt(max(||x||^2, eps^2)).
    ssq = jnp.sum(x * x, axis=-1, keepdims=True)
    x = x * lax.rsqrt(jnp.maximum(ssq, L2_EPS * L2_EPS))
    # NOTE: if a bundle dump shows the XLU (cross-lane reduces) saturating, the three
    # row reductions above could be moved to the MXU via a ones-RHS matmul (v6e/v7x).

    # masks: ONE wide bf16 MXU matmul with f32 accumulation.
    # w_ref: [D, KP] bf16; column c = m*GS + k holds l2-normalized prototype (k, m);
    # lanes k>=K inside a group and c>=M*GS are zero and never read below.
    s = jnp.dot(x.astype(w_ref.dtype), w_ref[...],
                preferred_element_type=jnp.float32)              # [TN, KP]

    # out_seg[n, k] = max_m masks[n, m, k].
    # Every slice starts at a multiple of 32 lanes and spans 20 lanes, so it never
    # crosses a 128-lane vreg boundary (single-vreg rotate at most, no funnel).
    out = s[:, 0:K]
    for m in range(1, M):                                        # static unroll (M=10)
        out = jnp.maximum(out, s[:, m * GS:m * GS + K])

    # mask_norm: LayerNorm over K.
    mean2 = jnp.mean(out, axis=-1, keepdims=True)
    oc = out - mean2
    var2 = jnp.mean(oc * oc, axis=-1, keepdims=True)
    out = oc * lax.rsqrt(var2 + LN_EPS)
    out = out * mg_ref[...] + mb_ref[...]

    out_ref[...] = out.astype(out_ref.dtype)


def prototype_head(feature3d, prototypes, feat_g, feat_b, mask_g, mask_b,
                   *, tile_n=1024, out_dtype=jnp.bfloat16):
    """feature3d: [N, 128] (any float dtype; bf16 recommended),
    prototypes: [20, 10, 128] (PyTorch layout)."""
    N, d = feature3d.shape
    assert d == D

    # Row tile: multiple of 16 (bf16 sublane packing). Clamp so the grid has >= ~8
    # steps (>= 4 per v7x core, lets the pipeline hide the first fetch).  N is NOT
    # padded: the last grid block may be ragged; Pallas masks its store and every
    # kernel op is row-local, so the stale rows in that block are never observable.
    tn = max(16, min(_round_up(tile_n, 16), _round_up(pl.cdiv(N, 8), 16)))
    grid_n = pl.cdiv(N, tn)

    # One-time (hoisted) prototype prep: l2-normalize in f32, pack [K, M, D] into
    # column c = m*GS + k (GS=32 keeps max-slices vreg-aligned), zero-pad to KP=384
    # lanes, transpose to a lane-dense bf16 RHS [D, KP] for the MXU.
    p = prototypes.astype(jnp.float32)
    p = p * lax.rsqrt(jnp.maximum(jnp.sum(p * p, axis=-1, keepdims=True),
                                  L2_EPS * L2_EPS))
    w = jnp.transpose(p, (1, 0, 2))                              # [M, K, D]
    w = jnp.pad(w, ((0, 0), (0, GS - K), (0, 0))).reshape(M * GS, D)
    w = jnp.pad(w, ((0, KP - M * GS), (0, 0))).T.astype(jnp.bfloat16)   # [D, KP]

    fg = feat_g.reshape(1, D).astype(jnp.float32)
    fb = feat_b.reshape(1, D).astype(jnp.float32)
    mg = mask_g.reshape(1, K).astype(jnp.float32)
    mb = mask_b.reshape(1, K).astype(jnp.float32)

    feat_bytes = N * D * feature3d.dtype.itemsize
    out_bytes = N * K * jnp.dtype(out_dtype).itemsize
    cost = pl.CostEstimate(
        flops=2 * N * D * KP + N * (8 * D + 2 * M * K + 10 * K),
        transcendentals=3 * N,
        bytes_accessed=feat_bytes + out_bytes + D * KP * 2 + 4 * (2 * D + 2 * K))

    return pl.pallas_call(
        proto_head_kernel,
        out_shape=jax.ShapeDtypeStruct((N, K), out_dtype),
        grid_spec=pltpu.PrefetchScalarGridSpec(
            num_scalar_prefetch=0,
            grid=(grid_n,),
            in_specs=[
                pl.BlockSpec((tn, D), lambda i: (i, 0)),
                pl.BlockSpec((D, KP), lambda i: (0, 0)),   # constant block index
                pl.BlockSpec((1, D), lambda i: (0, 0)),
                pl.BlockSpec((1, D), lambda i: (0, 0)),
                pl.BlockSpec((1, K), lambda i: (0, 0)),
                pl.BlockSpec((1, K), lambda i: (0, 0)),
            ],
            out_specs=pl.BlockSpec((tn, K), lambda i: (i, 0)),
        ),
        compiler_params=pltpu.CompilerParams(
            dimension_semantics=("parallel",)),
        cost_estimate=cost,
    )(feature3d, w, fg, fb, mg, mb)


def prototype_head_ref(feature3d, prototypes, fg, fb, mg, mb,
                       matmul_dtype=jnp.float32):
    """Pure-JAX reference mirroring the PyTorch forward (gt_semantic_seg=None).
    matmul_dtype=bfloat16 gives a precision-matched reference for the MXU path."""
    x = feature3d.astype(jnp.float32)
    mean = x.mean(-1, keepdims=True)
    var = ((x - mean) ** 2).mean(-1, keepdims=True)
    x = (x - mean) * lax.rsqrt(var + LN_EPS) * fg.reshape(1, D) + fb.reshape(1, D)
    x = x / jnp.maximum(jnp.linalg.norm(x, axis=-1, keepdims=True), L2_EPS)
    p = prototypes.astype(jnp.float32)
    p = p / jnp.maximum(jnp.linalg.norm(p, axis=-1, keepdims=True), L2_EPS)
    masks = jnp.einsum('nd,kmd->nmk',
                       x.astype(matmul_dtype), p.astype(matmul_dtype),
                       preferred_element_type=jnp.float32,
                       precision='highest')                       # [N, M, K]
    out = masks.max(axis=1)                                       # [N, K]
    mean2 = out.mean(-1, keepdims=True)
    var2 = ((out - mean2) ** 2).mean(-1, keepdims=True)
    out = (out - mean2) * lax.rsqrt(var2 + LN_EPS) * mg.reshape(1, K) + mb.reshape(1, K)
    return out


if __name__ == "__main__":
    key = jax.random.PRNGKey(0)
    k_im, k_px, k_py, k_w, k_pt, k_proto = jax.random.split(key, 6)

    # ---- small synthetic inputs consistent with the forward signature ----
    B, C, H, W = 2, 4, 16, 16
    P = 60                                        # points per batch element
    N = B * P                                     # 120: NOT a multiple of the tile -> exercises ragged last block
    im = jax.random.normal(k_im, (B, C, H, W), dtype=jnp.float32)   # NCHW
    px = jax.random.randint(k_px, (B, P), 0, W)
    py = jax.random.randint(k_py, (B, P), 0, H)

    # TODO(synk): encoder, decoder and kpclassifier are constructor-injected external
    # modules without definitions here; stand-in = deterministic 1x1 projection to 128
    # channels + point gather + a per-point random term emulating KPConv 3D aggregation.
    w_proj = jax.random.normal(k_w, (C, D), dtype=jnp.float32) * 0.1
    feats2d = jnp.einsum('bchw,cd->bhwd', im, w_proj)               # [B, H, W, D]
    gathered = feats2d[jnp.arange(B)[:, None], py, px, :].reshape(N, D)
    feature3d_f32 = gathered + 0.2 * jax.random.normal(k_pt, (N, D), dtype=jnp.float32)

    # ---- module parameters (shapes from __init__) ----
    # NOTE: the module initializes prototypes to zeros (degenerate output); anchor them
    # on actual feature rows (+noise) so the class logits have a realistic spread.
    idx = (jnp.arange(K * M) * 7) % N
    prototypes = (feature3d_f32[idx].reshape(K, M, D)
                  + 0.05 * jax.random.normal(k_proto, (K, M, D), dtype=jnp.float32))
    feat_g = jnp.ones((D,), jnp.float32)     # feat_norm.weight
    feat_b = jnp.zeros((D,), jnp.float32)    # feat_norm.bias
    mask_g = jnp.ones((K,), jnp.float32)     # mask_norm.weight
    mask_b = jnp.zeros((K,), jnp.float32)    # mask_norm.bias

    # TODO(synk): prototype_learning (sinkhorn + in-place prototype momentum update,
    # training only) and the dist.all_reduce are not part of the inference hot path.

    # bf16 point features halve the dominant HBM read; the same bf16 tensor is
    # consumed by the kernel and both references.
    feature3d = feature3d_f32.astype(jnp.bfloat16)

    # --- run 1: f32 output for tight numerical checks (kernel math is f32; only the
    #     MXU operands are bf16) ---
    out_f32 = prototype_head(feature3d, prototypes, feat_g, feat_b, mask_g, mask_b,
                             out_dtype=jnp.float32)
    out_f32 = jax.block_until_ready(out_f32)
    assert out_f32.shape == (N, K) and out_f32.dtype == jnp.float32

    # (1) strict f32 reference (PyTorch semantics). bf16 features + bf16 MXU operands
    #     give ~1e-3 logit error that mask_norm (LayerNorm over 20 logits) amplifies
    #     by roughly 1/std(logits); allow 3e-2.
    ref32 = prototype_head_ref(feature3d, prototypes, feat_g, feat_b, mask_g, mask_b)
    err32 = float(jnp.max(jnp.abs(out_f32 - ref32)))
    assert err32 < 3e-2, err32

    # (2) precision-matched reference (bf16 matmul operands, f32 accumulation).
    ref16 = prototype_head_ref(feature3d, prototypes, feat_g, feat_b, mask_g, mask_b,
                               matmul_dtype=jnp.bfloat16)
    err16 = float(jnp.max(jnp.abs(out_f32 - ref16)))
    assert err16 < 1e-2, err16

    # --- run 2: default (bf16) output — halves writeback traffic; differs from the
    #     f32-output run only by the final output rounding (<= ~1 bf16 ulp of |out|<=4.4).
    out_bf16 = prototype_head(feature3d, prototypes, feat_g, feat_b, mask_g, mask_b)
    out_bf16 = jax.block_until_ready(out_bf16)
    assert out_bf16.shape == (N, K) and out_bf16.dtype == jnp.bfloat16
    err_out = float(jnp.max(jnp.abs(out_bf16.astype(jnp.float32) - out_f32)))
    assert err_out < 2.5e-2, err_out

    print("KERNEL_OK")
</pallas_src>

<mosaic_0001>
module attributes {stable_mosaic.version = 11 : i64} {
  func.func @proto_head_kernel(%arg0: i32, %arg1: memref<16x128xbf16, #tpu.memory_space<vmem>>, %arg2: memref<128x384xbf16, #tpu.memory_space<vmem>>, %arg3: memref<1x128xf32, #tpu.memory_space<vmem>>, %arg4: memref<1x128xf32, #tpu.memory_space<vmem>>, %arg5: memref<1x20xf32, #tpu.memory_space<vmem>>, %arg6: memref<1x20xf32, #tpu.memory_space<vmem>>, %arg7: memref<16x20xf32, #tpu.memory_space<vmem>>) attributes {dimension_semantics = [#tpu.dimension_semantics<parallel>], iteration_bounds = array<i64: 8>, scalar_prefetch = 0 : i64, scratch_operands = 0 : i64, tpu.core_type = #tpu.core_type<tc>, window_params = [{transform_indices = @transform_0, window_bounds = array<i64: 16, 128>}, {pipeline_mode = #tpu.pipeline_mode<synchronous>, transform_indices = @transform_1, window_bounds = array<i64: 128, 384>}, {pipeline_mode = #tpu.pipeline_mode<synchronous>, transform_indices = @transform_2, window_bounds = array<i64: 1, 128>}, {pipeline_mode = #tpu.pipeline_mode<synchronous>, transform_indices = @transform_3, window_bounds = array<i64: 1, 128>}, {pipeline_mode = #tpu.pipeline_mode<synchronous>, transform_indices = @transform_4, window_bounds = array<i64: 1, 20>}, {pipeline_mode = #tpu.pipeline_mode<synchronous>, transform_indices = @transform_5, window_bounds = array<i64: 1, 20>}, {transform_indices = @transform_6, window_bounds = array<i64: 16, 20>}]} {
    %c0 = arith.constant 0 : index
    %c0_0 = arith.constant 0 : index
    %0 = vector.load %arg1[%c0, %c0_0] : memref<16x128xbf16, #tpu.memory_space<vmem>>, vector<16x128xbf16>
    %1 = arith.extf %0 : vector<16x128xbf16> to vector<16x128xf32>
    %cst = arith.constant dense<0.000000e+00> : vector<16xf32>
    %2 = vector.multi_reduction <add>, %1, %cst [1] : vector<16x128xf32> to vector<16xf32>
    %3 = vector.shape_cast %2 : vector<16xf32> to vector<16x1xf32>
    %cst_1 = arith.constant 1.280000e+02 : f32
    %4 = vector.broadcast %cst_1 : f32 to vector<16x1xf32>
    %5 = arith.divf %3, %4 : vector<16x1xf32>
    %6 = vector.broadcast %5 : vector<16x1xf32> to vector<16x128xf32>
    %7 = arith.subf %1, %6 : vector<16x128xf32>
    %8 = arith.mulf %7, %7 : vector<16x128xf32>
    %cst_2 = arith.constant dense<0.000000e+00> : vector<16xf32>
    %9 = vector.multi_reduction <add>, %8, %cst_2 [1] : vector<16x128xf32> to vector<16xf32>
    %10 = vector.shape_cast %9 : vector<16xf32> to vector<16x1xf32>
    %cst_3 = arith.constant 1.280000e+02 : f32
    %11 = vector.broadcast %cst_3 : f32 to vector<16x1xf32>
    %12 = arith.divf %10, %11 : vector<16x1xf32>
    %cst_4 = arith.constant 9.99999974E-6 : f32
    %13 = vector.broadcast %cst_4 : f32 to vector<16x1xf32>
    %14 = arith.addf %12, %13 : vector<16x1xf32>
    %15 = math.rsqrt %14 : vector<16x1xf32>
    %16 = vector.broadcast %15 : vector<16x1xf32> to vector<16x128xf32>
    %17 = arith.mulf %7, %16 : vector<16x128xf32>
    %c0_5 = arith.constant 0 : index
    %c0_6 = arith.constant 0 : index
    %18 = vector.load %arg3[%c0_5, %c0_6] : memref<1x128xf32, #tpu.memory_space<vmem>>, vector<1x128xf32>
    %19 = vector.broadcast %18 : vector<1x128xf32> to vector<16x128xf32>
    %20 = arith.mulf %17, %19 : vector<16x128xf32>
    %c0_7 = arith.constant 0 : index
    %c0_8 = arith.constant 0 : index
    %21 = vector.load %arg4[%c0_7, %c0_8] : memref<1x128xf32, #tpu.memory_space<vmem>>, vector<1x128xf32>
    %22 = vector.broadcast %21 : vector<1x128xf32> to vector<16x128xf32>
    %23 = arith.addf %20, %22 : vector<16x128xf32>
    %24 = arith.mulf %23, %23 : vector<16x128xf32>
    %cst_9 = arith.constant dense<0.000000e+00> : vector<16xf32>
    %25 = vector.multi_reduction <add>, %24, %cst_9 [1] : vector<16x128xf32> to vector<16xf32>
    %26 = vector.shape_cast %25 : vector<16xf32> to vector<16x1xf32>
    %cst_10 = arith.constant 1.000000e-24 : f32
    %27 = vector.broadcast %cst_10 : f32 to vector<16x1xf32>
    %28 = arith.maximumf %26, %27 : vector<16x1xf32>
    %29 = math.rsqrt %28 : vector<16x1xf32>
    %30 = vector.broadcast %29 : vector<16x1xf32> to vector<16x128xf32>
    %31 = arith.mulf %23, %30 : vector<16x128xf32>
    %32 = arith.truncf %31 : vector<16x128xf32> to vector<16x128xbf16>
    %c0_11 = arith.constant 0 : index
    %c0_12 = arith.constant 0 : index
    %33 = vector.load %arg2[%c0_11, %c0_12] : memref<128x384xbf16, #tpu.memory_space<vmem>>, vector<128x384xbf16>
    %cst_13 = arith.constant dense<0.000000e+00> : vector<16x384xf32>
    %34 = tpu.matmul %32, %33, %cst_13 {dimension_numbers = #tpu.dot_dimension_numbers<[1], [0], [0], [1], [0, 0, 1, 1], [], []>} : vector<16x128xbf16>, vector<128x384xbf16>, vector<16x384xf32> -> vector<16x384xf32>
    %35 = vector.extract_strided_slice %34 {offsets = [0, 0], sizes = [16, 20], strides = [1, 1]} : vector<16x384xf32> to vector<16x20xf32>
    %36 = vector.extract_strided_slice %34 {offsets = [0, 32], sizes = [16, 20], strides = [1, 1]} : vector<16x384xf32> to vector<16x20xf32>
    %37 = arith.maximumf %35, %36 : vector<16x20xf32>
    %38 = vector.extract_strided_slice %34 {offsets = [0, 64], sizes = [16, 20], strides = [1, 1]} : vector<16x384xf32> to vector<16x20xf32>
    %39 = arith.maximumf %37, %38 : vector<16x20xf32>
    %40 = vector.extract_strided_slice %34 {offsets = [0, 96], sizes = [16, 20], strides = [1, 1]} : vector<16x384xf32> to vector<16x20xf32>
    %41 = arith.maximumf %39, %40 : vector<16x20xf32>
    %42 = vector.extract_strided_slice %34 {offsets = [0, 128], sizes = [16, 20], strides = [1, 1]} : vector<16x384xf32> to vector<16x20xf32>
    %43 = arith.maximumf %41, %42 : vector<16x20xf32>
    %44 = vector.extract_strided_slice %34 {offsets = [0, 160], sizes = [16, 20], strides = [1, 1]} : vector<16x384xf32> to vector<16x20xf32>
    %45 = arith.maximumf %43, %44 : vector<16x20xf32>
    %46 = vector.extract_strided_slice %34 {offsets = [0, 192], sizes = [16, 20], strides = [1, 1]} : vector<16x384xf32> to vector<16x20xf32>
    %47 = arith.maximumf %45, %46 : vector<16x20xf32>
    %48 = vector.extract_strided_slice %34 {offsets = [0, 224], sizes = [16, 20], strides = [1, 1]} : vector<16x384xf32> to vector<16x20xf32>
    %49 = arith.maximumf %47, %48 : vector<16x20xf32>
    %50 = vector.extract_strided_slice %34 {offsets = [0, 256], sizes = [16, 20], strides = [1, 1]} : vector<16x384xf32> to vector<16x20xf32>
    %51 = arith.maximumf %49, %50 : vector<16x20xf32>
    %52 = vector.extract_strided_slice %34 {offsets = [0, 288], sizes = [16, 20], strides = [1, 1]} : vector<16x384xf32> to vector<16x20xf32>
    %53 = arith.maximumf %51, %52 : vector<16x20xf32>
    %cst_14 = arith.constant dense<0.000000e+00> : vector<16xf32>
    %54 = vector.multi_reduction <add>, %53, %cst_14 [1] : vector<16x20xf32> to vector<16xf32>
    %55 = vector.shape_cast %54 : vector<16xf32> to vector<16x1xf32>
    %cst_15 = arith.constant 2.000000e+01 : f32
    %56 = vector.broadcast %cst_15 : f32 to vector<16x1xf32>
    %57 = arith.divf %55, %56 : vector<16x1xf32>
    %58 = vector.broadcast %57 : vector<16x1xf32> to vector<16x20xf32>
    %59 = arith.subf %53, %58 : vector<16x20xf32>
    %60 = arith.mulf %59, %59 : vector<16x20xf32>
    %cst_16 = arith.constant dense<0.000000e+00> : vector<16xf32>
    %61 = vector.multi_reduction <add>, %60, %cst_16 [1] : vector<16x20xf32> to vector<16xf32>
    %62 = vector.shape_cast %61 : vector<16xf32> to vector<16x1xf32>
    %cst_17 = arith.constant 2.000000e+01 : f32
    %63 = vector.broadcast %cst_17 : f32 to vector<16x1xf32>
    %64 = arith.divf %62, %63 : vector<16x1xf32>
    %cst_18 = arith.constant 9.99999974E-6 : f32
    %65 = vector.broadcast %cst_18 : f32 to vector<16x1xf32>
    %66 = arith.addf %64, %65 : vector<16x1xf32>
    %67 = math.rsqrt %66 : vector<16x1xf32>
    %68 = vector.broadcast %67 : vector<16x1xf32> to vector<16x20xf32>
    %69 = arith.mulf %59, %68 : vector<16x20xf32>
    %c0_19 = arith.constant 0 : index
    %c0_20 = arith.constant 0 : index
    %70 = vector.load %arg5[%c0_19, %c0_20] : memref<1x20xf32, #tpu.memory_space<vmem>>, vector<1x20xf32>
    %71 = vector.broadcast %70 : vector<1x20xf32> to vector<16x20xf32>
    %72 = arith.mulf %69, %71 : vector<16x20xf32>
    %c0_21 = arith.constant 0 : index
    %c0_22 = arith.constant 0 : index
    %73 = vector.load %arg6[%c0_21, %c0_22] : memref<1x20xf32, #tpu.memory_space<vmem>>, vector<1x20xf32>
    %74 = vector.broadcast %73 : vector<1x20xf32> to vector<16x20xf32>
    %75 = arith.addf %72, %74 : vector<16x20xf32>
    %c0_23 = arith.constant 0 : index
    %c0_24 = arith.constant 0 : index
    %76 = vector.load %arg7[%c0_23, %c0_24] : memref<16x20xf32, #tpu.memory_space<vmem>>, vector<16x20xf32>
    tpu.vector_store %arg7[%c0_23, %c0_24], %75 {strides = array<i32>} : memref<16x20xf32, #tpu.memory_space<vmem>>, vector<16x20xf32>,
    return
  }
  func.func @transform_0(%arg0: i32) -> (i32, i32) {
    %c0_i32 = arith.constant 0 : i32
    %c0_i32_0 = arith.constant 0 : i32
    return %arg0, %c0_i32 : i32, i32
  }
  func.func @transform_1(%arg0: i32) -> (i32, i32) {
    %c0_i32 = arith.constant 0 : i32
    %c0_i32_0 = arith.constant 0 : i32
    %c0_i32_1 = arith.constant 0 : i32
    return %c0_i32, %c0_i32_0 : i32, i32
  }
  func.func @transform_2(%arg0: i32) -> (i32, i32) {
    %c0_i32 = arith.constant 0 : i32
    %c0_i32_0 = arith.constant 0 : i32
    %c0_i32_1 = arith.constant 0 : i32
    return %c0_i32, %c0_i32_0 : i32, i32
  }
  func.func @transform_3(%arg0: i32) -> (i32, i32) {
    %c0_i32 = arith.constant 0 : i32
    %c0_i32_0 = arith.constant 0 : i32
    %c0_i32_1 = arith.constant 0 : i32
    return %c0_i32, %c0_i32_0 : i32, i32
  }
  func.func @transform_4(%arg0: i32) -> (i32, i32) {
    %c0_i32 = arith.constant 0 : i32
    %c0_i32_0 = arith.constant 0 : i32
    %c0_i32_1 = arith.constant 0 : i32
    return %c0_i32, %c0_i32_0 : i32, i32
  }
  func.func @transform_5(%arg0: i32) -> (i32, i32) {
    %c0_i32 = arith.constant 0 : i32
    %c0_i32_0 = arith.constant 0 : i32
    %c0_i32_1 = arith.constant 0 : i32
    return %c0_i32, %c0_i32_0 : i32, i32
  }
  func.func @transform_6(%arg0: i32) -> (i32, i32) {
    %c0_i32 = arith.constant 0 : i32
    %c0_i32_0 = arith.constant 0 : i32
    return %arg0, %c0_i32 : i32, i32
  }
}

</mosaic_0001>

<llo_original>
// kernel: tpu_custom_call.1
$region0: #{tpu_custom_call.1}
  #allocation0 [shape = 'u32[]', space=smem, size = 0x4, offset = 0x4, fixed_abs, tag = 'smem constant byte address 0x4 - core index']
  #allocation1 [shape = 'u32[144,128]{1,0:T(1,128)}', space=vmem, size = 0x12000, scoped, tag = 'internal scratch']
  %s0 = inlined_call_operand.hbm [shape: bf16[120,128], index: 0, kind: input, shape index: {}]
  %s1 = inlined_call_operand.hbm [shape: bf16[128,384], index: 1, kind: input, shape index: {}]
  %s2 = inlined_call_operand.vmem [shape: f32[1,128], index: 2, kind: input, shape index: {}]
  %s3 = inlined_call_operand.vmem [shape: f32[1,128], index: 3, kind: input, shape index: {}]
  %s4 = inlined_call_operand.vmem [shape: f32[1,20], index: 4, kind: input, shape index: {}]
  %s5 = inlined_call_operand.vmem [shape: f32[1,20], index: 5, kind: input, shape index: {}]
  %s6 = inlined_call_operand.vmem [shape: f32[120,20], index: 6, kind: output, shape index: {}]
  %s7 = sld [smem:[#allocation0]]
  $region113: #{tpu_custom_call.1} parent=0
    _
  %s9 = ssub.s32 1, %s7
  %s10 = scalar_select 0, %s9, %s7
  $region1: #{tpu_custom_call.1} parent=0
    #allocation2 [shape = 'u8[8192]{0}', space=vmem, size = 0x2000, scoped, tag = 'input window, operand 0']
    #allocation3 [shape = 's32[2]{0}', space=sflag, size = 0x8, scoped, tag = 'scoped memory for tpu_custom_call.1']
    #allocation4 [shape = 'u8[98304]{0}', space=vmem, size = 0x18000, scoped, tag = 'input window, operand 1, single buffered']
    #allocation5 [shape = 's32[1]{0}', space=sflag, size = 0x4, scoped, tag = 'scoped memory for tpu_custom_call.1']
    #allocation6 [shape = 'u8[16384]{0}', space=vmem, size = 0x4000, scoped, tag = 'output window, operand 0']
    %11 = vsyncpa [#allocation3], 0
    %s12 = scalar_lea.sflag [#allocation3], 1
    %13 = vsyncpa %s12, 0
    %14 = vsyncpa [#allocation5], 0
    loop: start=0, step=1, limit=10
    $region2: #{tpu_custom_call.1} parent=1 // loop_pre_header
      _
    $region3: #{tpu_custom_call.1} parent=1 // loop_header
      %s16 = sphi 0, %s20
      %p17 = scmp.ge.s32.totalorder %s16, 10
      %s26 = sphi 0, %s28
      %s29 = sphi 0, %s26
      %s30 = sphi 0, %s29
      %s46 = sphi 0, %s30
      %s50 = sphi 0, %s50
      %s52 = sphi 0, %s50
      %s53 = sphi 0, %s52
      %s67 = sphi 0, %s53
      %s71 = sphi 0, %s71
      %s73 = sphi 0, %s71
      %s74 = sphi 0, %s73
      %s88 = sphi 0, %s74
      %s92 = sphi 0, %s92
      %s94 = sphi 0, %s92
      %s95 = sphi 0, %s94
      %s109 = sphi 0, %s95
      %s113 = sphi 0, %s113
      %s115 = sphi 0, %s113
      %s116 = sphi 0, %s115
      %s130 = sphi 0, %s116
      %s134 = sphi 0, %s134
      %s136 = sphi 0, %s134
      %s137 = sphi 0, %s136
      %s151 = sphi 0, %s137
      %s157 = sphi 0, %s159
      %s160 = sphi 0, %s157
      %s161 = sphi 0, %s160
      %s177 = sphi 0, %s161
    $region4: #{tpu_custom_call.1} parent=1 // loop_header_branch
      %19 = sbr.rel (%p17) target = $region8
    $region5: #{tpu_custom_call.1} parent=1 // loop_body
      %s21 = ssub.s32 %s16, 1
      %s22 = ssub.s32 %s16, 2
      %s23 = sadd.s32 %s16, 1
      %s24 = ssub.s32 %s16, %s23
      %p25 = scmp.eq.s32.totalorder %s24, 0
      %s27 = sadd.s32 %s26, 1
      %s28 = scalar_select %p25, %s26, %s27
      %p31 = pneg %p25
      %p32 = scmp.eq.s32.totalorder %s16, 7
      %p33 = por %p31, %p32
      %p34 = scmp.ne.s32.totalorder %s26, %s29
      %p35 = scmp.eq.s32.totalorder %s16, 0
      %p36 = por %p34, %p35
      %p37 = scmp.ne.s32.totalorder %s26, %s29
      %p38 = scmp.eq.s32.totalorder %s21, 7
      %p39 = por %p37, %p38
      %p40 = scmp.ne.s32.totalorder %s29, %s30
      %p41 = scmp.eq.s32.totalorder %s21, 0
      %p42 = por %p40, %p41
      %p43 = scmp.ne.s32.totalorder %s29, %s30
      %p44 = scmp.eq.s32.totalorder %s22, 7
      %p45 = por %p43, %p44
      %p47 = scmp.ne.s32.totalorder %s30, %s46
      %p48 = scmp.eq.s32.totalorder %s22, 0
      %p49 = por %p47, %p48
      %s51 = sadd.s32 %s50, 1
      %p54 = scmp.eq.s32.totalorder %s16, 7
      %p55 = scmp.ne.s32.totalorder %s50, %s52
      %p56 = scmp.eq.s32.totalorder %s16, 0
      %p57 = por %p55, %p56
      %p58 = scmp.ne.s32.totalorder %s50, %s52
      %p59 = scmp.eq.s32.totalorder %s21, 7
      %p60 = por %p58, %p59
      %p61 = scmp.ne.s32.totalorder %s52, %s53
      %p62 = scmp.eq.s32.totalorder %s21, 0
      %p63 = por %p61, %p62
      %p64 = scmp.ne.s32.totalorder %s52, %s53
      %p65 = scmp.eq.s32.totalorder %s22, 7
      %p66 = por %p64, %p65
      %p68 = scmp.ne.s32.totalorder %s53, %s67
      %p69 = scmp.eq.s32.totalorder %s22, 0
      %p70 = por %p68, %p69
      %s72 = sadd.s32 %s71, 1
      %p75 = scmp.eq.s32.totalorder %s16, 7
      %p76 = scmp.ne.s32.totalorder %s71, %s73
      %p77 = scmp.eq.s32.totalorder %s16, 0
      %p78 = por %p76, %p77
      %p79 = scmp.ne.s32.totalorder %s71, %s73
      %p80 = scmp.eq.s32.totalorder %s21, 7
      %p81 = por %p79, %p80
      %p82 = scmp.ne.s32.totalorder %s73, %s74
      %p83 = scmp.eq.s32.totalorder %s21, 0
      %p84 = por %p82, %p83
      %p85 = scmp.ne.s32.totalorder %s73, %s74
      %p86 = scmp.eq.s32.totalorder %s22, 7
      %p87 = por %p85, %p86
      %p89 = scmp.ne.s32.totalorder %s74, %s88
      %p90 = scmp.eq.s32.totalorder %s22, 0
      %p91 = por %p89, %p90
      %s93 = sadd.s32 %s92, 1
      %p96 = scmp.eq.s32.totalorder %s16, 7
      %p97 = scmp.ne.s32.totalorder %s92, %s94
      %p98 = scmp.eq.s32.totalorder %s16, 0
      %p99 = por %p97, %p98
      %p100 = scmp.ne.s32.totalorder %s92, %s94
      %p101 = scmp.eq.s32.totalorder %s21, 7
      %p102 = por %p100, %p101
      %p103 = scmp.ne.s32.totalorder %s94, %s95
      %p104 = scmp.eq.s32.totalorder %s21, 0
      %p105 = por %p103, %p104
      %p106 = scmp.ne.s32.totalorder %s94, %s95
      %p107 = scmp.eq.s32.totalorder %s22, 7
      %p108 = por %p106, %p107
      %p110 = scmp.ne.s32.totalorder %s95, %s109
      %p111 = scmp.eq.s32.totalorder %s22, 0
      %p112 = por %p110, %p111
      %s114 = sadd.s32 %s113, 1
      %p117 = scmp.eq.s32.totalorder %s16, 7
      %p118 = scmp.ne.s32.totalorder %s113, %s115
      %p119 = scmp.eq.s32.totalorder %s16, 0
      %p120 = por %p118, %p119
      %p121 = scmp.ne.s32.totalorder %s113, %s115
      %p122 = scmp.eq.s32.totalorder %s21, 7
      %p123 = por %p121, %p122
      %p124 = scmp.ne.s32.totalorder %s115, %s116
      %p125 = scmp.eq.s32.totalorder %s21, 0
      %p126 = por %p124, %p125
      %p127 = scmp.ne.s32.totalorder %s115, %s116
      %p128 = scmp.eq.s32.totalorder %s22, 7
      %p129 = por %p127, %p128
      %p131 = scmp.ne.s32.totalorder %s116, %s130
      %p132 = scmp.eq.s32.totalorder %s22, 0
      %p133 = por %p131, %p132
      %s135 = sadd.s32 %s134, 1
      %p138 = scmp.eq.s32.totalorder %s16, 7
      %p139 = scmp.ne.s32.totalorder %s134, %s136
      %p140 = scmp.eq.s32.totalorder %s16, 0
      %p141 = por %p139, %p140
      %p142 = scmp.ne.s32.totalorder %s134, %s136
      %p143 = scmp.eq.s32.totalorder %s21, 7
      %p144 = por %p142, %p143
      %p145 = scmp.ne.s32.totalorder %s136, %s137
      %p146 = scmp.eq.s32.totalorder %s21, 0
      %p147 = por %p145, %p146
      %p148 = scmp.ne.s32.totalorder %s136, %s137
      %p149 = scmp.eq.s32.totalorder %s22, 7
      %p150 = por %p148, %p149
      %p152 = scmp.ne.s32.totalorder %s137, %s151
      %p153 = scmp.eq.s32.totalorder %s22, 0
      %p154 = por %p152, %p153
      %s155 = ssub.s32 %s16, %s23
      %p156 = scmp.eq.s32.totalorder %s155, 0
      %s158 = sadd.s32 %s157, 1
      %s159 = scalar_select %p156, %s157, %s158
      %p162 = pneg %p156
      %p163 = scmp.eq.s32.totalorder %s16, 7
      %p164 = por %p162, %p163
      %p165 = scmp.ne.s32.totalorder %s157, %s160
      %p166 = scmp.eq.s32.totalorder %s16, 0
      %p167 = por %p165, %p166
      %p168 = scmp.ne.s32.totalorder %s157, %s160
      %p169 = scmp.eq.s32.totalorder %s21, 7
      %p170 = por %p168, %p169
      %p171 = scmp.ne.s32.totalorder %s160, %s161
      %p172 = scmp.eq.s32.totalorder %s21, 0
      %p173 = por %p171, %p172
      %p174 = scmp.ne.s32.totalorder %s160, %s161
      %p175 = scmp.eq.s32.totalorder %s22, 7
      %p176 = por %p174, %p175
      %p178 = scmp.ne.s32.totalorder %s161, %s177
      %p179 = scmp.eq.s32.totalorder %s22, 0
      %p180 = por %p178, %p179
      %p181 = scmp.le.s32.totalorder 1, %s16
      %p182 = scmp.lt.s32.totalorder %s16, 9
      %p183 = pnand %p181, %p182
      %p184 = pneg %p183
      // Predicated region
      $region9: #{tpu_custom_call.1} parent=5 // pred_check
        _
      $region10: #{tpu_custom_call.1} parent=5 // pred_check_branch
        %186 = sbr.rel (%p183) target = $region12
      $region11: #{tpu_custom_call.1} parent=5 // pred_region
        %s187 = ssub.s32 %s16, 1
        // Predicated region
        $region13: #{tpu_custom_call.1} parent=11 // pred_check
          %p188 = pneg %p63
        $region14: #{tpu_custom_call.1} parent=11 // pred_check_branch
          %190 = sbr.rel (%p188) target = $region16
        $region15: #{tpu_custom_call.1} parent=11 // pred_region
          %s192 = ssub.s32 3072, 3072
          %193 = vsyncadd [#allocation5], %s192
          %s194 = sshll.u32 [#allocation4], 4
          %s195 = int_to_ptr.vmem [resolvable:$true] %s194
          %200 = dma.hbm_to_vmem [thread:$0]  %s1, 3072, %s195, [#allocation5], 192, 192, 12
        $region16: #{tpu_custom_call.1} parent=11 // pred_fallthru
          _
        // Predicated region
        $region17: #{tpu_custom_call.1} parent=11 // pred_check
          %p201 = pneg %p84
        $region18: #{tpu_custom_call.1} parent=11 // pred_check_branch
          %203 = sbr.rel (%p201) target = $region20
        $region19: #{tpu_custom_call.1} parent=11 // pred_region
          _
        $region20: #{tpu_custom_call.1} parent=11 // pred_fallthru
          _
        // Predicated region
        $region21: #{tpu_custom_call.1} parent=11 // pred_check
          %p204 = pneg %p105
        $region22: #{tpu_custom_call.1} parent=11 // pred_check_branch
          %206 = sbr.rel (%p204) target = $region24
        $region23: #{tpu_custom_call.1} parent=11 // pred_region
          _
        $region24: #{tpu_custom_call.1} parent=11 // pred_fallthru
          _
        // Predicated region
        $region25: #{tpu_custom_call.1} parent=11 // pred_check
          %p207 = pneg %p126
        $region26: #{tpu_custom_call.1} parent=11 // pred_check_branch
          %209 = sbr.rel (%p207) target = $region28
        $region27: #{tpu_custom_call.1} parent=11 // pred_region
          _
        $region28: #{tpu_custom_call.1} parent=11 // pred_fallthru
          _
        // Predicated region
        $region29: #{tpu_custom_call.1} parent=11 // pred_check
          %p210 = pneg %p147
        $region30: #{tpu_custom_call.1} parent=11 // pred_check_branch
          %212 = sbr.rel (%p210) target = $region32
        $region31: #{tpu_custom_call.1} parent=11 // pred_region
          _
        $region32: #{tpu_custom_call.1} parent=11 // pred_fallthru
          _
      $region12: #{tpu_custom_call.1} parent=5 // pred_fallthru
        _
      %p213 = scmp.lt.s32.totalorder %s16, 8
      // Predicated region
      $region33: #{tpu_custom_call.1} parent=5 // pred_check
        %p214 = pneg %p213
      $region34: #{tpu_custom_call.1} parent=5 // pred_check_branch
        %216 = sbr.rel (%p214) target = $region36
      $region35: #{tpu_custom_call.1} parent=5 // pred_region
        // Predicated region
        $region37: #{tpu_custom_call.1} parent=35 // pred_check
          %p217 = pneg %p36
        $region38: #{tpu_custom_call.1} parent=35 // pred_check_branch
          %219 = sbr.rel (%p217) target = $region40
        $region39: #{tpu_custom_call.1} parent=35 // pred_region
          %s220 = sand.u32 %s26, 1
          %s221 = scalar_lea.sflag [#allocation3], %s220
          %s222 = sand.u32 %s26, 1
          %s223 = smul.addr %s222, 8
          %s224 = scalar_lea.vmem [#allocation2], %s223
          %s225 = smul.u32 2, %s16
          %s226 = ssub.s32 15, %s225
          %p227 = scmp.lt.s32.totalorder %s226, 2
          %s228 = scalar_select %p227, %s226, 2
          %s229 = smul.u32 64, %s228
          %s231 = ssub.s32 128, %s229
          %232 = vsyncadd %s221, %s231
          %p233 = scmp.ne.s32.totalorder 0, %s229
          %s234 = smul.addr %s225, 64
          %s235 = scalar_lea.hbm %s0, %s234
          %s236 = smul.u32 4, %s228
          %s237 = sshll.u32 %s224, 4
          %s238 = int_to_ptr.vmem [resolvable:$true] %s237
          %s239 = sshll.u32 %s236, 4
          %243 = dma.hbm_to_vmem [thread:$0]  (%p233), %s235, %s239, %s238, %s221, 64, 64, 4
        $region40: #{tpu_custom_call.1} parent=35 // pred_fallthru
          _
      $region36: #{tpu_custom_call.1} parent=5 // pred_fallthru
        _
      %p244 = scmp.le.s32.totalorder 1, %s16
      %p245 = scmp.lt.s32.totalorder %s16, 9
      %p246 = pnand %p244, %p245
      %p247 = pneg %p246
      // Predicated region
      $region41: #{tpu_custom_call.1} parent=5 // pred_check
        _
      $region42: #{tpu_custom_call.1} parent=5 // pred_check_branch
        %249 = sbr.rel (%p246) target = $region44
      $region43: #{tpu_custom_call.1} parent=5 // pred_region
        %s250 = ssub.s32 %s16, 1
        %s251 = sand.u32 %s29, 1
        %s252 = scalar_lea.sflag [#allocation3], %s251
        %s253 = sand.u32 %s29, 1
        %s254 = smul.addr %s253, 8
        %s255 = scalar_lea.vmem [#allocation2], %s254
        // Predicated region
        $region45: #{tpu_custom_call.1} parent=43 // pred_check
          %p256 = pneg %p42
        $region46: #{tpu_custom_call.1} parent=43 // pred_check_branch
          %258 = sbr.rel (%p256) target = $region48
        $region47: #{tpu_custom_call.1} parent=43 // pred_region
          %259 = dma.done %s252, 128
        $region48: #{tpu_custom_call.1} parent=43 // pred_fallthru
          _
        // Predicated region
        $region49: #{tpu_custom_call.1} parent=43 // pred_check
          %p260 = pneg %p63
        $region50: #{tpu_custom_call.1} parent=43 // pred_check_branch
          %262 = sbr.rel (%p260) target = $region52
        $region51: #{tpu_custom_call.1} parent=43 // pred_region
          %263 = dma.done [#allocation5], 3072
        $region52: #{tpu_custom_call.1} parent=43 // pred_fallthru
          _
        %s264 = sand.u32 %s29, 1
        %s265 = scalar_lea.sflag [#allocation3], %s264
        %s266 = sand.u32 %s29, 1
        %s267 = smul.addr %s266, 8
        %s268 = scalar_lea.vmem [#allocation2], %s267
        %p269 = pneg %p42
        %p270 = pneg %p39
        %p271 = pneg %p63
        %p272 = pneg %p60
        %p273 = pneg %p84
        %p274 = pneg %p81
        %p275 = pneg %p105
        %p276 = pneg %p102
        %p277 = pneg %p126
        %p278 = pneg %p123
        %p279 = pneg %p147
        %p280 = pneg %p144
        %p281 = pneg %p173
        %p282 = pneg %p170
        %s283 = sand.u32 %s160, 1
        %s284 = sand.u32 %s160, 1
        %s285 = smul.addr %s284, 16
        %s286 = scalar_lea.vmem [#allocation6], %s285
        %s287 = smul.u32 2, %s21
        %s288 = ssub.s32 15, %s287
        %p289 = scmp.lt.s32.totalorder %s288, 2
        %s290 = scalar_select %p289, %s288, 2
        %s291 = smul.u32 64, %s290
        %s292 = smul.u32 2, %s21
        %s293 = ssub.s32 15, %s292
        %p294 = scmp.lt.s32.totalorder %s293, 2
        %s295 = scalar_select %p294, %s293, 2
        %s296 = smul.u32 128, %s295
        %v298 = vld [vmem:[%s255] sm:$0xf]
        %v299 = vld [vmem:[%s255 + $0x4] sm:$0xf]
        %v300 = vunpack.c.l.bf16 %v298
        %v301 = vunpack.c.l.bf16 %v299
        %302 = vadd.xlane.f32.xlu0 %v300
        %v303 = vpop.xlane.xlu0 %302
        %304 = vadd.xlane.f32.xlu0 %v301
        %v305 = vpop.xlane.xlu0 %304
        %v306 = vrcp.pop 128.0
        %v307 = vmul.f32 %v303, %v306
        %v308 = vmul.f32 %v305, %v306
        %v309 = vsub.f32 %v300, %v307
        %v310 = vsub.f32 %v301, %v308
        %v311 = vmul.f32 %v309, %v309
        %v312 = vmul.f32 %v310, %v310
        %313 = vadd.xlane.f32.xlu0 %v311
        %v314 = vpop.xlane.xlu0 %313
        %315 = vadd.xlane.f32.xlu0 %v312
        %v316 = vpop.xlane.xlu0 %315
        %v317 = vmul.f32 %v314, %v306
        %v318 = vmul.f32 %v316, %v306
        %v319 = vadd.f32 %v317, 1e-05
        %v320 = vadd.f32 %v318, 1e-05
        %v321 = vrsqrt.pop %v319
        %v322 = vrsqrt.pop %v320
        %v323 = vmul.f32 %v309, %v321
        %v324 = vmul.f32 %v310, %v322
        %v325 = vld [vmem:[%s2] sm:$0x1]
        %v327 = vlaneseq
        %v328 = vshrl.u32 %v327, 7
        %v329 = vsub.s32 0, %v328
        %v330 = vrot.slane %v325, %v329
        %v332 = vmul.f32 %v323, %v330
        %v333 = vmul.f32 %v324, %v330
        %v334 = vld [vmem:[%s3] sm:$0x1]
        %v336 = vlaneseq
        %v337 = vshrl.u32 %v336, 7
        %v338 = vsub.s32 0, %v337
        %v339 = vrot.slane %v334, %v338
        %v341 = vadd.f32 %v332, %v339
        %v342 = vadd.f32 %v333, %v339
        %v343 = vmul.f32 %v341, %v341
        %v344 = vmul.f32 %v342, %v342
        %345 = vadd.xlane.f32.xlu0 %v343
        %v346 = vpop.xlane.xlu0 %345
        %347 = vadd.xlane.f32.xlu0 %v344
        %v348 = vpop.xlane.xlu0 %347
        %v349 = vmax.f32 %v346, 1e-24
        %v350 = vmax.f32 %v348, 1e-24
        %v351 = vrsqrt.pop %v349
        %v352 = vrsqrt.pop %v350
        %v353 = vmul.f32 %v341, %v351
        %v354 = vmul.f32 %v342, %v352
        %v355 = vpack.c.bf16 %v354, %v353
        %v356 = vld [vmem:[#allocation4] sm:$0xff]
        %v357 = vld [vmem:[#allocation4 + $0x8] sm:$0xf]
        %v358 = vld [vmem:[#allocation4 + $0xc] sm:$0xff]
        %v359 = vld [vmem:[#allocation4 + $0x14] sm:$0xf]
        %v360 = vld [vmem:[#allocation4 + $0x18] sm:$0xff]
        %v361 = vld [vmem:[#allocation4 + $0x20] sm:$0xf]
        %v362 = vld [vmem:[#allocation4 + $0x24] sm:$0xff]
        %v363 = vld [vmem:[#allocation4 + $0x2c] sm:$0xf]
        %v364 = vld [vmem:[#allocation4 + $0x30] sm:$0xff]
        %v365 = vld [vmem:[#allocation4 + $0x38] sm:$0xf]
        %v366 = vld [vmem:[#allocation4 + $0x3c] sm:$0xff]
        %v367 = vld [vmem:[#allocation4 + $0x44] sm:$0xf]
        %v368 = vld [vmem:[#allocation4 + $0x48] sm:$0xff]
        %v369 = vld [vmem:[#allocation4 + $0x50] sm:$0xf]
        %v370 = vld [vmem:[#allocation4 + $0x54] sm:$0xff]
        %v371 = vld [vmem:[#allocation4 + $0x5c] sm:$0xf]
        %v372 = vld [vmem:[#allocation4 + $0x60] sm:$0xff]
        %v373 = vld [vmem:[#allocation4 + $0x68] sm:$0xf]
        %v374 = vld [vmem:[#allocation4 + $0x6c] sm:$0xff]
        %v375 = vld [vmem:[#allocation4 + $0x74] sm:$0xf]
        %v376 = vld [vmem:[#allocation4 + $0x78] sm:$0xff]
        %v377 = vld [vmem:[#allocation4 + $0x80] sm:$0xf]
        %v378 = vld [vmem:[#allocation4 + $0x84] sm:$0xff]
        %v379 = vld [vmem:[#allocation4 + $0x8c] sm:$0xf]
        %v380 = vld [vmem:[#allocation4 + $0x90] sm:$0xff]
        %v381 = vld [vmem:[#allocation4 + $0x98] sm:$0xf]
        %v382 = vld [vmem:[#allocation4 + $0x9c] sm:$0xff]
        %v383 = vld [vmem:[#allocation4 + $0xa4] sm:$0xf]
        %v384 = vld [vmem:[#allocation4 + $0xa8] sm:$0xff]
        %v385 = vld [vmem:[#allocation4 + $0xb0] sm:$0xf]
        %v386 = vld [vmem:[#allocation4 + $0xb4] sm:$0xff]
        %v387 = vld [vmem:[#allocation4 + $0xbc] sm:$0xf]
        %v420 = vunpack.c.l.b16 %v356
        %v421 = vunpack.c.h.b16 %v356
        %v422 = vunpack.c.l.b16 %v357
        %v423 = vunpack.c.l.b16 %v358
        %v424 = vunpack.c.h.b16 %v358
        %v425 = vunpack.c.l.b16 %v359
        %v426 = vunpack.c.l.b16 %v360
        %v427 = vunpack.c.h.b16 %v360
        %v428 = vunpack.c.l.b16 %v361
        %v429 = vunpack.c.l.b16 %v362
        %v430 = vunpack.c.h.b16 %v362
        %v431 = vunpack.c.l.b16 %v363
        %v432 = vunpack.c.l.b16 %v364
        %v433 = vunpack.c.h.b16 %v364
        %v434 = vunpack.c.l.b16 %v365
        %v435 = vunpack.c.l.b16 %v366
        %v436 = vunpack.c.h.b16 %v366
        %v437 = vunpack.c.l.b16 %v367
        %v438 = vunpack.c.l.b16 %v368
        %v439 = vunpack.c.h.b16 %v368
        %v440 = vunpack.c.l.b16 %v369
        %v441 = vunpack.c.l.b16 %v370
        %v442 = vunpack.c.h.b16 %v370
        %v443 = vunpack.c.l.b16 %v371
        %v444 = vunpack.c.l.b16 %v372
        %v445 = vunpack.c.h.b16 %v372
        %v446 = vunpack.c.l.b16 %v373
        %v447 = vunpack.c.l.b16 %v374
        %v448 = vunpack.c.h.b16 %v374
        %v449 = vunpack.c.l.b16 %v375
        %v450 = vunpack.c.l.b16 %v376
        %v451 = vunpack.c.h.b16 %v376
        %v452 = vunpack.c.l.b16 %v377
        %v453 = vunpack.c.l.b16 %v378
        %v454 = vunpack.c.h.b16 %v378
        %v455 = vunpack.c.l.b16 %v379
        %v456 = vunpack.c.l.b16 %v380
        %v457 = vunpack.c.h.b16 %v380
        %v458 = vunpack.c.l.b16 %v381
        %v459 = vunpack.c.l.b16 %v382
        %v460 = vunpack.c.h.b16 %v382
        %v461 = vunpack.c.l.b16 %v383
        %v462 = vunpack.c.l.b16 %v384
        %v463 = vunpack.c.h.b16 %v384
        %v464 = vunpack.c.l.b16 %v385
        %v465 = vunpack.c.l.b16 %v386
        %v466 = vunpack.c.h.b16 %v386
        %v467 = vunpack.c.l.b16 %v387
        %v468 = vpack.c.b16 %v423, %v420
        %v469 = vpack.c.b16 %v424, %v421
        %v470 = vpack.c.b16 %v425, %v422
        %v471 = vpack.c.b16 %v429, %v426
        %v472 = vpack.c.b16 %v430, %v427
        %v473 = vpack.c.b16 %v431, %v428
        %v474 = vpack.c.b16 %v435, %v432
        %v475 = vpack.c.b16 %v436, %v433
        %v476 = vpack.c.b16 %v437, %v434
        %v477 = vpack.c.b16 %v441, %v438
        %v478 = vpack.c.b16 %v442, %v439
        %v479 = vpack.c.b16 %v443, %v440
        %v480 = vpack.c.b16 %v447, %v444
        %v481 = vpack.c.b16 %v448, %v445
        %v482 = vpack.c.b16 %v449, %v446
        %v483 = vpack.c.b16 %v453, %v450
        %v484 = vpack.c.b16 %v454, %v451
        %v485 = vpack.c.b16 %v455, %v452
        %v486 = vpack.c.b16 %v459, %v456
        %v487 = vpack.c.b16 %v460, %v457
        %v488 = vpack.c.b16 %v461, %v458
        %v489 = vpack.c.b16 %v465, %v462
        %v490 = vpack.c.b16 %v466, %v463
        %v491 = vpack.c.b16 %v467, %v464
        %516 = vmatprep.subr.bf16.mxu0 %v490
        %517 = vmatpush1.bf16.msra.mxu0 %v489
        %518 = vmatprep.subr.bf16.mxu0 %v487
        %519 = vmatpush1.bf16.msra.mxu0 %v486
        %520 = vmatprep.subr.bf16.mxu0 %v484
        %521 = vmatpush1.bf16.msra.mxu0 %v483
        %522 = vmatprep.subr.bf16.mxu0 %v481
        %523 = vmatpush1.bf16.msra.mxu0 %v480
        %524 = vmatprep.subr.bf16.mxu0 %v478
        %525 = vmatpush1.bf16.msra.mxu0 %v477
        %526 = vmatprep.subr.bf16.mxu0 %v475
        %527 = vmatpush1.bf16.msra.mxu0 %v474
        %528 = vmatprep.subr.bf16.mxu0 %v472
        %529 = vmatpush1.bf16.msra.mxu0 %v471
        %530 = vmatprep.subr.bf16.mxu0 %v469
        %531 = vmatpush1.bf16.msra.mxu0 %v468
        %532 = vmatprep.subr.bf16.mxu0 0
        %533 = vmatpush2.bf16.msra.mxu0 0
        %534 = vmatprep.subr.bf16.mxu0 0
        %535 = vmatpush2.bf16.msra.mxu0 0
        %536 = vmatprep.subr.bf16.mxu0 0
        %537 = vmatpush2.bf16.msra.mxu0 0
        %538 = vmatprep.subr.bf16.mxu0 0
        %539 = vmatpush2.bf16.msra.mxu0 0
        %540 = vmatprep.subr.bf16.mxu0 0
        %541 = vmatpush2.bf16.msra.mxu0 0
        %542 = vmatprep.subr.bf16.mxu0 0
        %543 = vmatpush2.bf16.msra.mxu0 0
        %544 = vmatprep.subr.bf16.mxu0 0
        %545 = vmatpush2.bf16.msra.mxu0 0
        %546 = vmatprep.subr.bf16.mxu0 0
        %547 = vmatpush2.bf16.msra.mxu0 0
        %548 = vmatprep.mubr.bf16.mxu0 0
        %549 = vmatmul.mubr.bf16.gmra.mxu0 %v355
        %v550 = vpop.f32.mrf.mxu0
        %v551 = vadd.f32 0.0, %v550
        %v552 = vpop.f32.mrf.mxu0
        %v553 = vadd.f32 0.0, %v552
        %v554 = vpop.f32.mrf.mxu0
        %v555 = vadd.f32 0.0, %v554
        %v556 = vpop.f32.mrf.mxu0
        %v557 = vadd.f32 0.0, %v556
        %558 = vdwg.mxu0
        %559 = vmatprep.subr.bf16.mxu0 0
        %560 = vmatpush1.bf16.msra.mxu0 %v491
        %561 = vmatprep.subr.bf16.mxu0 0
        %562 = vmatpush1.bf16.msra.mxu0 %v488
        %563 = vmatprep.subr.bf16.mxu0 0
        %564 = vmatpush1.bf16.msra.mxu0 %v485
        %565 = vmatprep.subr.bf16.mxu0 0
        %566 = vmatpush1.bf16.msra.mxu0 %v482
        %567 = vmatprep.subr.bf16.mxu0 0
        %568 = vmatpush1.bf16.msra.mxu0 %v479
        %569 = vmatprep.subr.bf16.mxu0 0
        %570 = vmatpush1.bf16.msra.mxu0 %v476
        %571 = vmatprep.subr.bf16.mxu0 0
        %572 = vmatpush1.bf16.msra.mxu0 %v473
        %573 = vmatprep.subr.bf16.mxu0 0
        %574 = vmatpush1.bf16.msra.mxu0 %v470
        %575 = vmatprep.subr.bf16.mxu0 0
        %576 = vmatpush2.bf16.msra.mxu0 0
        %577 = vmatprep.subr.bf16.mxu0 0
        %578 = vmatpush2.bf16.msra.mxu0 0
        %579 = vmatprep.subr.bf16.mxu0 0
        %580 = vmatpush2.bf16.msra.mxu0 0
        %581 = vmatprep.subr.bf16.mxu0 0
        %582 = vmatpush2.bf16.msra.mxu0 0
        %583 = vmatprep.subr.bf16.mxu0 0
        %584 = vmatpush2.bf16.msra.mxu0 0
        %585 = vmatprep.subr.bf16.mxu0 0
        %586 = vmatpush2.bf16.msra.mxu0 0
        %587 = vmatprep.subr.bf16.mxu0 0
        %588 = vmatpush2.bf16.msra.mxu0 0
        %589 = vmatprep.subr.bf16.mxu0 0
        %590 = vmatpush2.bf16.msra.mxu0 0
        %591 = vmatprep.mubr.bf16.mxu0 0
        %592 = vmatmul.mubr.bf16.gmra.mxu0 %v355
        %v593 = vpop.f32.mrf.mxu0
        %v594 = vadd.f32 0.0, %v593
        %v595 = vpop.f32.mrf.mxu0
        %v596 = vpop.f32.mrf.mxu0
        %v597 = vadd.f32 0.0, %v596
        %v598 = vpop.f32.mrf.mxu0
        %599 = vdwg.mxu0
        %602 = vrot.lane.b32.xlu0 %v551, 96
        %v603 = vpop.permute.xlu0 %602
        %604 = vrot.lane.b32.xlu0 %v555, 96
        %v605 = vpop.permute.xlu0 %604
        %v608 = vmax.f32 %v551, %v603
        %v609 = vmax.f32 %v555, %v605
        %610 = vrot.lane.b32.xlu0 %v551, 64
        %v611 = vpop.permute.xlu0 %610
        %612 = vrot.lane.b32.xlu0 %v555, 64
        %v613 = vpop.permute.xlu0 %612
        %v616 = vmax.f32 %v608, %v611
        %v617 = vmax.f32 %v609, %v613
        %618 = vrot.lane.b32.xlu0 %v551, 32
        %v619 = vpop.permute.xlu0 %618
        %620 = vrot.lane.b32.xlu0 %v555, 32
        %v621 = vpop.permute.xlu0 %620
        %v624 = vmax.f32 %v616, %v619
        %v625 = vmax.f32 %v617, %v621
        %v626 = vmax.f32 %v624, %v553
        %v627 = vmax.f32 %v625, %v557
        %630 = vrot.lane.b32.xlu0 %v553, 96
        %v631 = vpop.permute.xlu0 %630
        %632 = vrot.lane.b32.xlu0 %v557, 96
        %v633 = vpop.permute.xlu0 %632
        %v636 = vmax.f32 %v626, %v631
        %v637 = vmax.f32 %v627, %v633
        %638 = vrot.lane.b32.xlu0 %v553, 64
        %v639 = vpop.permute.xlu0 %638
        %640 = vrot.lane.b32.xlu0 %v557, 64
        %v641 = vpop.permute.xlu0 %640
        %v644 = vmax.f32 %v636, %v639
        %v645 = vmax.f32 %v637, %v641
        %646 = vrot.lane.b32.xlu0 %v553, 32
        %v647 = vpop.permute.xlu0 %646
        %648 = vrot.lane.b32.xlu0 %v557, 32
        %v649 = vpop.permute.xlu0 %648
        %v652 = vmax.f32 %v644, %v647
        %v653 = vmax.f32 %v645, %v649
        %v654 = vmax.f32 %v652, %v594
        %v655 = vmax.f32 %v653, %v597
        %658 = vrot.lane.b32.xlu0 %v594, 96
        %v659 = vpop.permute.xlu0 %658
        %660 = vrot.lane.b32.xlu0 %v597, 96
        %v661 = vpop.permute.xlu0 %660
        %v664 = vmax.f32 %v654, %v659
        %v665 = vmax.f32 %v655, %v661
        %vm666 = vcmask 162816
        %v667 = vsel %vm666, %v664, 0.0
        %668 = vadd.xlane.f32.xlu0 %v667
        %v669 = vpop.xlane.xlu0 %668
        %v670 = vsel %vm666, %v665, 0.0
        %671 = vadd.xlane.f32.xlu0 %v670
        %v672 = vpop.xlane.xlu0 %671
        %v673 = vrcp.pop 20.0
        %v674 = vmul.f32 %v669, %v673
        %v675 = vmul.f32 %v672, %v673
        %v676 = vsub.f32 %v664, %v674
        %v677 = vsub.f32 %v665, %v675
        %v678 = vmul.f32 %v676, %v676
        %v679 = vmul.f32 %v677, %v677
        %v680 = vsel %vm666, %v678, 0.0
        %681 = vadd.xlane.f32.xlu0 %v680
        %v682 = vpop.xlane.xlu0 %681
        %v683 = vsel %vm666, %v679, 0.0
        %684 = vadd.xlane.f32.xlu0 %v683
        %v685 = vpop.xlane.xlu0 %684
        %v686 = vmul.f32 %v682, %v673
        %v687 = vmul.f32 %v685, %v673
        %v688 = vadd.f32 %v686, 1e-05
        %v689 = vadd.f32 %v687, 1e-05
        %v690 = vrsqrt.pop %v688
        %v691 = vrsqrt.pop %v689
        %v692 = vmul.f32 %v676, %v690
        %v693 = vmul.f32 %v677, %v691
        %v694 = vld [vmem:[%s4] sm:$0x1]
        %v696 = vlaneseq
        %v697 = vshrl.u32 %v696, 7
        %v698 = vsub.s32 0, %v697
        %v699 = vrot.slane %v694, %v698
        %v701 = vmul.f32 %v692, %v699
        %v702 = vmul.f32 %v693, %v699
        %v703 = vld [vmem:[%s5] sm:$0x1]
        %v705 = vlaneseq
        %v706 = vshrl.u32 %v705, 7
        %v707 = vsub.s32 0, %v706
        %v708 = vrot.slane %v703, %v707
        %v710 = vadd.f32 %v701, %v708
        %v711 = vadd.f32 %v702, %v708
        %712 = vst.msk [vmem:[%s286] sm:$0xff] %vm666, %v710
        %713 = vst.msk [vmem:[%s286 + $0x8] sm:$0xff] %vm666, %v711
        %s714 = sand.u32 %s160, 1
        %s715 = sand.u32 %s160, 1
        %s716 = smul.addr %s715, 16
        %s717 = scalar_lea.vmem [#allocation6], %s716
        // Predicated region
        $region53: #{tpu_custom_call.1} parent=43 // pred_check
          %p718 = pneg %p170
        $region54: #{tpu_custom_call.1} parent=43 // pred_check_branch
          %720 = sbr.rel (%p718) target = $region56
        $region55: #{tpu_custom_call.1} parent=43 // pred_region
          %s721 = smul.u32 2, %s21
          %s722 = ssub.s32 15, %s721
          %p723 = scmp.lt.s32.totalorder %s722, 2
          %s724 = scalar_select %p723, %s722, 2
          %s725 = smul.u32 128, %s724
          %p726 = scmp.ne.s32.totalorder 0, %s725
          %s727 = smul.addr %s721, 8
          %s728 = scalar_lea.vmem %s6, %s727
          // Predicated region
          $region57: #{tpu_custom_call.1} parent=55 // pred_check
            %p729 = pneg %p726
          $region58: #{tpu_custom_call.1} parent=55 // pred_check_branch
            %731 = sbr.rel (%p729) target = $region60
          $region59: #{tpu_custom_call.1} parent=55 // pred_region
            // Predicated region
            $region61: #{tpu_custom_call.1} parent=59 // pred_check
              _
            $region62: #{tpu_custom_call.1} parent=59 // pred_check_branch
              %733 = sbr.rel (0) target = $region64
            $region63: #{tpu_custom_call.1} parent=59 // pred_region
              // Predicated region
              $region83: #{tpu_custom_call.1} parent=63 // pred_check
                _
              $region84: #{tpu_custom_call.1} parent=63 // pred_check_branch
                %785 = sbr.rel (0) target = $region86
              $region85: #{tpu_custom_call.1} parent=63 // pred_region
                %s786 = sshrl.u32 %s724, 1
                // While loop
                $region87: #{tpu_custom_call.1} parent=85 // loop_pre_header
                  _
                $region88: #{tpu_custom_call.1} parent=85 // loop_header
                  %s788 = sphi 0, %s790
                  %p789 = scmp.ge.s32.totalorder %s788, %s786
                  %s793 = sphi 0, %s802
                  %s794 = sphi %s717, %s805
                  %s795 = sphi %s728, %s806
                $region89: #{tpu_custom_call.1} parent=85 // loop_header_branch
                  %792 = sbr.rel (%p789) target = $region93
                $region90: #{tpu_custom_call.1} parent=85 // loop_body
                  %v796 = vld [vmem:[%s794] sm:$0xff]
                  %797 = vst [vmem:[%s795] sm:$0xff] %v796
                  %v798 = vld [vmem:[%s794 + $0x8] sm:$0xff]
                  %799 = vst [vmem:[%s795 + $0x8] sm:$0xff] %v798
                  %s800 = sadd.s32 1, %s793
                  %p801 = scmp.ge.s32.totalorder %s800, %s786
                  %s802 = scalar_select %p801, 0, %s800
                  %s803 = smul.u32 %s802, 16
                  %s804 = smul.u32 %s802, 16
                  %s805 = scalar_lea.vmem %s717, %s803 [#allocation6]
                  %s806 = scalar_lea.vmem %s728, %s804
                $region91: #{tpu_custom_call.1} parent=85 // loop_footer
                  %s790 = sadd.s32 %s788, 1
                $region92: #{tpu_custom_call.1} parent=85 // loop_footer_branch
                  %787 = sbr.rel target = $region88
                $region93: #{tpu_custom_call.1} parent=85 // loop_exit
                  _
                %s807 = sshrl.u32 %s724, 1
                %s808 = sand.u32 %s724, 1
                %s809 = smul.u32 %s807, 2
                %s810 = smul.u32 8, %s809
                %s811 = scalar_lea.vmem %s717, %s810 [#allocation6]
                %s812 = smul.u32 8, %s809
                %s813 = scalar_lea.vmem %s728, %s812
                // While loop
                $region94: #{tpu_custom_call.1} parent=85 // loop_pre_header
                  _
                $region95: #{tpu_custom_call.1} parent=85 // loop_header
                  %s815 = sphi 0, %s817
                  %p816 = scmp.ge.s32.totalorder %s815, %s808
                  %s820 = sphi 0, %s827
                  %s821 = sphi %s811, %s830
                  %s822 = sphi %s813, %s831
                $region96: #{tpu_custom_call.1} parent=85 // loop_header_branch
                  %819 = sbr.rel (%p816) target = $region100
                $region97: #{tpu_custom_call.1} parent=85 // loop_body
                  %v823 = vld [vmem:[%s821] sm:$0xff]
                  %824 = vst [vmem:[%s822] sm:$0xff] %v823
                  %s825 = sadd.s32 1, %s820
                  %p826 = scmp.ge.s32.totalorder %s825, %s808
                  %s827 = scalar_select %p826, 0, %s825
                  %s828 = smul.u32 %s827, 8
                  %s829 = smul.u32 %s827, 8
                  %s830 = scalar_lea.vmem %s811, %s828 [#allocation6]
                  %s831 = scalar_lea.vmem %s813, %s829
                $region98: #{tpu_custom_call.1} parent=85 // loop_footer
                  %s817 = sadd.s32 %s815, 1
                $region99: #{tpu_custom_call.1} parent=85 // loop_footer_branch
                  %814 = sbr.rel target = $region95
                $region100: #{tpu_custom_call.1} parent=85 // loop_exit
                  _
              $region86: #{tpu_custom_call.1} parent=63 // pred_fallthru
                _
              // Predicated region
              $region101: #{tpu_custom_call.1} parent=63 // pred_check
                _
              $region102: #{tpu_custom_call.1} parent=63 // pred_check_branch
                %833 = sbr.rel target = $region104
              $region103: #{tpu_custom_call.1} parent=63 // pred_region
                _
              $region104: #{tpu_custom_call.1} parent=63 // pred_fallthru
                _
            $region64: #{tpu_custom_call.1} parent=59 // pred_fallthru
              _
            // Predicated region
            $region65: #{tpu_custom_call.1} parent=59 // pred_check
              _
            $region66: #{tpu_custom_call.1} parent=59 // pred_check_branch
              %735 = sbr.rel target = $region68
            $region67: #{tpu_custom_call.1} parent=59 // pred_region
              %s737 = ssub.s32 256, 1
              %s738 = sshrl.u32 %s724, 1
              // While loop
              $region69: #{tpu_custom_call.1} parent=67 // loop_pre_header
                _
              $region70: #{tpu_custom_call.1} parent=67 // loop_header
                %s740 = sphi 0, %s742
                %p741 = scmp.ge.s32.totalorder %s740, %s738
                %s745 = sphi 0, %s754
                %s746 = sphi %s717, %s757
                %s747 = sphi %s728, %s758
              $region71: #{tpu_custom_call.1} parent=67 // loop_header_branch
                %744 = sbr.rel (%p741) target = $region75
              $region72: #{tpu_custom_call.1} parent=67 // loop_body
                %v748 = vld [vmem:[%s746] sm:%s737]
                %749 = vst [vmem:[%s747] sm:%s737] %v748
                %v750 = vld [vmem:[%s746 + $0x8] sm:%s737]
                %751 = vst [vmem:[%s747 + $0x8] sm:%s737] %v750
                %s752 = sadd.s32 1, %s745
                %p753 = scmp.ge.s32.totalorder %s752, %s738
                %s754 = scalar_select %p753, 0, %s752
                %s755 = smul.u32 %s754, 16
                %s756 = smul.u32 %s754, 16
                %s757 = scalar_lea.vmem %s717, %s755 [#allocation6]
                %s758 = scalar_lea.vmem %s728, %s756
              $region73: #{tpu_custom_call.1} parent=67 // loop_footer
                %s742 = sadd.s32 %s740, 1
              $region74: #{tpu_custom_call.1} parent=67 // loop_footer_branch
                %739 = sbr.rel target = $region70
              $region75: #{tpu_custom_call.1} parent=67 // loop_exit
                _
              %s759 = sshrl.u32 %s724, 1
              %s760 = sand.u32 %s724, 1
              %s761 = smul.u32 %s759, 2
              %s762 = smul.u32 8, %s761
              %s763 = scalar_lea.vmem %s717, %s762 [#allocation6]
              %s764 = smul.u32 8, %s761
              %s765 = scalar_lea.vmem %s728, %s764
              // While loop
              $region76: #{tpu_custom_call.1} parent=67 // loop_pre_header
                _
              $region77: #{tpu_custom_call.1} parent=67 // loop_header
                %s767 = sphi 0, %s769
                %p768 = scmp.ge.s32.totalorder %s767, %s760
                %s772 = sphi 0, %s779
                %s773 = sphi %s763, %s782
                %s774 = sphi %s765, %s783
              $region78: #{tpu_custom_call.1} parent=67 // loop_header_branch
                %771 = sbr.rel (%p768) target = $region82
              $region79: #{tpu_custom_call.1} parent=67 // loop_body
                %v775 = vld [vmem:[%s773] sm:%s737]
                %776 = vst [vmem:[%s774] sm:%s737] %v775
                %s777 = sadd.s32 1, %s772
                %p778 = scmp.ge.s32.totalorder %s777, %s760
                %s779 = scalar_select %p778, 0, %s777
                %s780 = smul.u32 %s779, 8
                %s781 = smul.u32 %s779, 8
                %s782 = scalar_lea.vmem %s763, %s780 [#allocation6]
                %s783 = scalar_lea.vmem %s765, %s781
              $region80: #{tpu_custom_call.1} parent=67 // loop_footer
                %s769 = sadd.s32 %s767, 1
              $region81: #{tpu_custom_call.1} parent=67 // loop_footer_branch
                %766 = sbr.rel target = $region77
              $region82: #{tpu_custom_call.1} parent=67 // loop_exit
                _
            $region68: #{tpu_custom_call.1} parent=59 // pred_fallthru
              _
          $region60: #{tpu_custom_call.1} parent=55 // pred_fallthru
            _
          %834 = vnop
        $region56: #{tpu_custom_call.1} parent=43 // pred_fallthru
          _
      $region44: #{tpu_custom_call.1} parent=5 // pred_fallthru
        _
      %p835 = scmp.le.s32.totalorder 2, %s16
      // Predicated region
      $region105: #{tpu_custom_call.1} parent=5 // pred_check
        %p836 = pneg %p835
      $region106: #{tpu_custom_call.1} parent=5 // pred_check_branch
        %838 = sbr.rel (%p836) target = $region108
      $region107: #{tpu_custom_call.1} parent=5 // pred_region
        %s839 = ssub.s32 %s16, 2
        // Predicated region
        $region109: #{tpu_custom_call.1} parent=107 // pred_check
          %p840 = pneg %p176
        $region110: #{tpu_custom_call.1} parent=107 // pred_check_branch
          %842 = sbr.rel (%p840) target = $region112
        $region111: #{tpu_custom_call.1} parent=107 // pred_region
          %s843 = sand.u32 %s161, 1
          %s844 = sand.u32 %s161, 1
          %s845 = smul.addr %s844, 16
          %s846 = scalar_lea.vmem [#allocation6], %s845
        $region112: #{tpu_custom_call.1} parent=107 // pred_fallthru
          _
      $region108: #{tpu_custom_call.1} parent=5 // pred_fallthru
        _
    $region6: #{tpu_custom_call.1} parent=1 // loop_footer
      %s20 = sadd.s32 1, %s16
    $region7: #{tpu_custom_call.1} parent=1 // loop_footer_branch
      %15 = sbr.rel target = $region3
    $region8: #{tpu_custom_call.1} parent=1 // loop_exit
      _
    %847 = vsyncpa [#allocation3], 1
    %s848 = scalar_lea.sflag [#allocation3], 1
    %849 = vsyncpa %s848, 1
    %850 = vsyncpa [#allocation5], 1

</llo_original>
